<compile_context>
chip_gen: v5e
topology: v5e:2x2
jax: 0.10.0
libtpu: 0.0.40
codegen_flags: <defaults>
</compile_context>

<pallas_src>
import functools

import jax
import jax.numpy as jnp
from jax import lax
from jax.experimental import pallas as pl
from jax.experimental.pallas import tpu as pltpu

EPS = 1e-5
KH = KW = 3
LANE = 128        # lane width: pad K and Cout to multiples of this
TILE_ROWS = 256   # MXU M-tile; multiple of 8


def _round_up(x, m):
    return (x + m - 1) // m * m


def _pick_tile(padded, candidates=(512, 256, 128)):
    for t in candidates:
        if padded % t == 0:
            return t
    return padded


# ---------------------------------------------------------------------------
# Pass 1: conv as a K-tiled matmul + per-row-tile BN partial statistics.
# ---------------------------------------------------------------------------
def conv_stats_kernel(p_ref, w_ref, conv_ref, stats_ref, acc_ref):
    # p_ref     : (TILE_ROWS, TILE_K)    im2col patch tile (zero-padded)
    # w_ref     : (TILE_K, TILE_C)       weight tile (zero-padded)
    # conv_ref  : (TILE_ROWS, TILE_C)    conv output tile (f32)
    # stats_ref : (8, TILE_C)            sublane 0 = sum, sublane 1 = sum of sq
    # acc_ref   : (TILE_ROWS, TILE_C)    f32 accumulator (VMEM scratch)
    k = pl.program_id(2)

    @pl.when(k == 0)
    def _():
        acc_ref[...] = jnp.zeros_like(acc_ref)

    acc_ref[...] += jnp.dot(p_ref[...], w_ref[...],
                            preferred_element_type=jnp.float32)

    @pl.when(k == pl.num_programs(2) - 1)
    def _():
        acc = acc_ref[...]
        conv_ref[...] = acc
        s = jnp.sum(acc, axis=0, keepdims=True)          # (1, TILE_C)
        ss = jnp.sum(acc * acc, axis=0, keepdims=True)   # (1, TILE_C)
        pad = jnp.zeros((6, acc.shape[1]), jnp.float32)
        stats_ref[...] = jnp.concatenate([s, ss, pad], axis=0)


# ---------------------------------------------------------------------------
# Pass 2: apply BN (precomputed per-channel scale/shift) + ReLU.
# ---------------------------------------------------------------------------
def bn_relu_kernel(conv_ref, scale_ref, shift_ref, out_ref):
    # conv_ref  : (TILE_ROWS, TILE_C)
    # scale_ref : (8, TILE_C)  (row 0 used; replicated to 8 sublanes for alignment)
    # shift_ref : (8, TILE_C)
    y = conv_ref[...] * scale_ref[0:1, :] + shift_ref[0:1, :]
    out_ref[...] = jnp.maximum(y, 0.0)


# ---------------------------------------------------------------------------
# Wrapper
# ---------------------------------------------------------------------------
@functools.partial(jax.jit, static_argnames=("matmul_dtype",))
def conv_block(x_nchw, w_oihw, gamma, beta, *, matmul_dtype=jnp.float32):
    """x_nchw: (N, Cin, H, W) -> (N, Cout, H, W), float32.

    matmul_dtype: jnp.bfloat16 is recommended on v6e/v7x; the f32 default keeps
    the tight numerical check in __main__ happy.
    """
    N, Cin, H, W = x_nchw.shape
    Cout = w_oihw.shape[0]

    # NCHW -> NHWC (channels on the lane axis), zero-pad spatially (padding=1).
    x_nhwc = jnp.transpose(x_nchw, (0, 2, 3, 1)).astype(jnp.float32)
    xp = jnp.pad(x_nhwc, ((0, 0), (1, 1), (1, 1), (0, 0)))

    # im2col: rows = N*H*W, columns ordered (kh, kw, cin).
    taps = [xp[:, kh:kh + H, kw:kw + W, :] for kh in range(KH) for kw in range(KW)]
    patches = jnp.concatenate(taps, axis=-1).reshape(N * H * W, KH * KW * Cin)

    # Weight OIHW -> (KH*KW*Cin, Cout) with the same (kh, kw, cin) ordering.
    w_mat = jnp.transpose(w_oihw, (2, 3, 1, 0)).reshape(KH * KW * Cin, Cout)
    w_mat = w_mat.astype(jnp.float32)

    # Pad everything to MXU / lane friendly shapes (zeros are harmless: they
    # contribute 0 to the conv and to the BN sums, and are sliced off at the end).
    R = N * H * W
    K = KH * KW * Cin
    Rpad = _round_up(R, TILE_ROWS)
    Kpad = _round_up(K, LANE)
    Cpad = _round_up(Cout, LANE)

    patches = jnp.pad(patches, ((0, Rpad - R), (0, Kpad - K))).astype(matmul_dtype)
    w_mat = jnp.pad(w_mat, ((0, Kpad - K), (0, Cpad - Cout))).astype(matmul_dtype)

    tile_k = _pick_tile(Kpad)
    tile_c = _pick_tile(Cpad)
    n_row = Rpad // TILE_ROWS
    n_col = Cpad // tile_c
    n_k = Kpad // tile_k

    # ---- pass 1: conv + per-row-tile sum / sum-of-squares ----------------
    conv_out, stats = pl.pallas_call(
        conv_stats_kernel,
        out_shape=(
            jax.ShapeDtypeStruct((Rpad, Cpad), jnp.float32),
            jax.ShapeDtypeStruct((n_row * 8, Cpad), jnp.float32),
        ),
        grid=(n_row, n_col, n_k),
        in_specs=[
            pl.BlockSpec((TILE_ROWS, tile_k), lambda i, j, k: (i, k)),
            pl.BlockSpec((tile_k, tile_c), lambda i, j, k: (k, j)),
        ],
        out_specs=(
            pl.BlockSpec((TILE_ROWS, tile_c), lambda i, j, k: (i, j)),
            pl.BlockSpec((8, tile_c), lambda i, j, k: (i, j)),
        ),
        scratch_shapes=[pltpu.VMEM((TILE_ROWS, tile_c), jnp.float32)],
        compiler_params=pltpu.CompilerParams(
            dimension_semantics=("parallel", "parallel", "arbitrary"),
        ),
    )(patches, w_mat)

    # ---- BN finalize (tiny, per-channel): global mean/var -> scale/shift --
    stats = stats.reshape(n_row, 8, Cpad)
    count = jnp.float32(R)  # true row count; zero-padded rows contributed 0
    mean = jnp.sum(stats[:, 0, :], axis=0) / count                       # (Cpad,)
    var = jnp.maximum(jnp.sum(stats[:, 1, :], axis=0) / count - mean * mean, 0.0)
    gamma_p = jnp.pad(gamma.astype(jnp.float32), (0, Cpad - Cout))
    beta_p = jnp.pad(beta.astype(jnp.float32), (0, Cpad - Cout))
    scale = gamma_p * lax.rsqrt(var + EPS)
    shift = beta_p - mean * scale
    scale8 = jnp.broadcast_to(scale[None, :], (8, Cpad))
    shift8 = jnp.broadcast_to(shift[None, :], (8, Cpad))

    # ---- pass 2: normalize + ReLU ----------------------------------------
    out_flat = pl.pallas_call(
        bn_relu_kernel,
        out_shape=jax.ShapeDtypeStruct((Rpad, Cpad), jnp.float32),
        grid=(n_row, n_col),
        in_specs=[
            pl.BlockSpec((TILE_ROWS, tile_c), lambda i, j: (i, j)),
            pl.BlockSpec((8, tile_c), lambda i, j: (0, j)),
            pl.BlockSpec((8, tile_c), lambda i, j: (0, j)),
        ],
        out_specs=pl.BlockSpec((TILE_ROWS, tile_c), lambda i, j: (i, j)),
        compiler_params=pltpu.CompilerParams(
            dimension_semantics=("parallel", "parallel"),
        ),
    )(conv_out, scale8, shift8)

    # Drop row/channel padding, back to NCHW.
    out_nhwc = out_flat[:R, :Cout].reshape(N, H, W, Cout)
    return jnp.transpose(out_nhwc, (0, 3, 1, 2))


# ---------------------------------------------------------------------------
# Pure-JAX reference (matches nn.Conv2d(bias=False) + training-mode BN + ReLU)
# ---------------------------------------------------------------------------
def conv_block_ref(x_nchw, w_oihw, gamma, beta):
    conv = lax.conv_general_dilated(
        x_nchw, w_oihw, window_strides=(1, 1), padding=((1, 1), (1, 1)),
        dimension_numbers=("NCHW", "OIHW", "NCHW"))
    mean = conv.mean(axis=(0, 2, 3), keepdims=True)
    var = conv.var(axis=(0, 2, 3), keepdims=True)  # biased, like BN normalization
    y = (conv - mean) * lax.rsqrt(var + EPS)
    y = y * gamma.reshape(1, -1, 1, 1) + beta.reshape(1, -1, 1, 1)
    return jnp.maximum(y, 0.0)


if __name__ == "__main__":
    N, Cin, Cout, H, W = 2, 4, 8, 16, 16

    key = jax.random.PRNGKey(0)
    kx, kw, kg, kb = jax.random.split(key, 4)
    x = jax.random.normal(kx, (N, Cin, H, W), dtype=jnp.float32)
    w = jax.random.normal(kw, (Cout, Cin, KH, KW), dtype=jnp.float32) * 0.1
    gamma = 1.0 + 0.1 * jax.random.normal(kg, (Cout,), dtype=jnp.float32)
    beta = 0.1 * jax.random.normal(kb, (Cout,), dtype=jnp.float32)

    out = conv_block(x, w, gamma, beta)
    out = jax.block_until_ready(out)

    ref = conv_block_ref(x, w, gamma, beta)
    assert out.shape == (N, Cout, H, W)
    max_err = jnp.max(jnp.abs(out - ref))
    assert jnp.allclose(out, ref, atol=1e-3, rtol=1e-3), f"max err {max_err}"
    print("KERNEL_OK")
</pallas_src>

<mosaic_0001>
module attributes {stable_mosaic.version = 11 : i64} {
  func.func @conv_stats_kernel(%arg0: i32, %arg1: i32, %arg2: i32, %arg3: memref<256x128xf32, #tpu.memory_space<vmem>>, %arg4: memref<128x128xf32, #tpu.memory_space<vmem>>, %arg5: memref<256x128xf32, #tpu.memory_space<vmem>>, %arg6: memref<8x128xf32, #tpu.memory_space<vmem>>, %arg7: memref<256x128xf32, #tpu.memory_space<vmem>>) attributes {dimension_semantics = [#tpu.dimension_semantics<parallel>, #tpu.dimension_semantics<parallel>, #tpu.dimension_semantics<arbitrary>], iteration_bounds = array<i64: 2, 1, 1>, scalar_prefetch = 0 : i64, scratch_operands = 1 : i64, tpu.core_type = #tpu.core_type<tc>, window_params = [{transform_indices = @transform_0, window_bounds = array<i64: 256, 128>}, {transform_indices = @transform_1, window_bounds = array<i64: 128, 128>}, {transform_indices = @transform_2, window_bounds = array<i64: 256, 128>}, {transform_indices = @transform_3, window_bounds = array<i64: 8, 128>}]} {
    %c0_i32 = arith.constant 0 : i32
    %0 = arith.cmpi eq, %arg2, %c0_i32 : i32
    %1 = arith.extui %0 : i1 to i32
    %c0_i32_0 = arith.constant 0 : i32
    %2 = arith.cmpi ne, %1, %c0_i32_0 : i32
    scf.if %2 {
      %cst_10 = arith.constant 0.000000e+00 : f32
      %12 = vector.broadcast %cst_10 : f32 to vector<256x128xf32>
      %c0_11 = arith.constant 0 : index
      %c0_12 = arith.constant 0 : index
      %13 = vector.load %arg7[%c0_11, %c0_12] : memref<256x128xf32, #tpu.memory_space<vmem>>, vector<256x128xf32>
      tpu.vector_store %arg7[%c0_11, %c0_12], %12 {strides = array<i32>} : memref<256x128xf32, #tpu.memory_space<vmem>>, vector<256x128xf32>,
    } else {
    }
    %c0 = arith.constant 0 : index
    %c0_1 = arith.constant 0 : index
    %3 = vector.load %arg7[%c0, %c0_1] : memref<256x128xf32, #tpu.memory_space<vmem>>, vector<256x128xf32>
    %c0_2 = arith.constant 0 : index
    %c0_3 = arith.constant 0 : index
    %4 = vector.load %arg3[%c0_2, %c0_3] : memref<256x128xf32, #tpu.memory_space<vmem>>, vector<256x128xf32>
    %c0_4 = arith.constant 0 : index
    %c0_5 = arith.constant 0 : index
    %5 = vector.load %arg4[%c0_4, %c0_5] : memref<128x128xf32, #tpu.memory_space<vmem>>, vector<128x128xf32>
    %cst = arith.constant dense<0.000000e+00> : vector<256x128xf32>
    %6 = tpu.matmul %4, %5, %cst {dimension_numbers = #tpu.dot_dimension_numbers<[1], [0], [0], [1], [0, 0, 1, 1], [], []>} : vector<256x128xf32>, vector<128x128xf32>, vector<256x128xf32> -> vector<256x128xf32>
    %7 = arith.addf %3, %6 : vector<256x128xf32>
    %c0_6 = arith.constant 0 : index
    %c0_7 = arith.constant 0 : index
    %8 = vector.load %arg7[%c0_6, %c0_7] : memref<256x128xf32, #tpu.memory_space<vmem>>, vector<256x128xf32>
    tpu.vector_store %arg7[%c0_6, %c0_7], %7 {strides = array<i32>} : memref<256x128xf32, #tpu.memory_space<vmem>>, vector<256x128xf32>,
    %c0_i32_8 = arith.constant 0 : i32
    %9 = arith.cmpi eq, %arg2, %c0_i32_8 : i32
    %10 = arith.extui %9 : i1 to i32
    %c0_i32_9 = arith.constant 0 : i32
    %11 = arith.cmpi ne, %10, %c0_i32_9 : i32
    scf.if %11 {
      %c0_10 = arith.constant 0 : index
      %c0_11 = arith.constant 0 : index
      %12 = vector.load %arg7[%c0_10, %c0_11] : memref<256x128xf32, #tpu.memory_space<vmem>>, vector<256x128xf32>
      %c0_12 = arith.constant 0 : index
      %c0_13 = arith.constant 0 : index
      %13 = vector.load %arg5[%c0_12, %c0_13] : memref<256x128xf32, #tpu.memory_space<vmem>>, vector<256x128xf32>
      tpu.vector_store %arg5[%c0_12, %c0_13], %12 {strides = array<i32>} : memref<256x128xf32, #tpu.memory_space<vmem>>, vector<256x128xf32>,
      %cst_14 = arith.constant dense<0.000000e+00> : vector<128xf32>
      %14 = vector.multi_reduction <add>, %12, %cst_14 [0] : vector<256x128xf32> to vector<128xf32>
      %15 = vector.shape_cast %14 : vector<128xf32> to vector<1x128xf32>
      %16 = arith.mulf %12, %12 : vector<256x128xf32>
      %cst_15 = arith.constant dense<0.000000e+00> : vector<128xf32>
      %17 = vector.multi_reduction <add>, %16, %cst_15 [0] : vector<256x128xf32> to vector<128xf32>
      %18 = vector.shape_cast %17 : vector<128xf32> to vector<1x128xf32>
      %cst_16 = arith.constant 0.000000e+00 : f32
      %19 = vector.broadcast %cst_16 : f32 to vector<6x128xf32>
      %20 = tpu.concatenate %15, %18, %19 in 0 : vector<1x128xf32>, vector<1x128xf32>, vector<6x128xf32> -> vector<8x128xf32>
      %c0_17 = arith.constant 0 : index
      %c0_18 = arith.constant 0 : index
      %21 = vector.load %arg6[%c0_17, %c0_18] : memref<8x128xf32, #tpu.memory_space<vmem>>, vector<8x128xf32>
      tpu.vector_store %arg6[%c0_17, %c0_18], %20 {strides = array<i32>} : memref<8x128xf32, #tpu.memory_space<vmem>>, vector<8x128xf32>,
    } else {
    }
    return
  }
  func.func @transform_0(%arg0: i32, %arg1: i32, %arg2: i32) -> (i32, i32) {
    %c0_i32 = arith.constant 0 : i32
    return %arg0, %arg2 : i32, i32
  }
  func.func @transform_1(%arg0: i32, %arg1: i32, %arg2: i32) -> (i32, i32) {
    %c0_i32 = arith.constant 0 : i32
    return %arg2, %arg1 : i32, i32
  }
  func.func @transform_2(%arg0: i32, %arg1: i32, %arg2: i32) -> (i32, i32) {
    %c0_i32 = arith.constant 0 : i32
    return %arg0, %arg1 : i32, i32
  }
  func.func @transform_3(%arg0: i32, %arg1: i32, %arg2: i32) -> (i32, i32) {
    %c0_i32 = arith.constant 0 : i32
    return %arg0, %arg1 : i32, i32
  }
}

module attributes {stable_mosaic.version = 11 : i64} {
  func.func @bn_relu_kernel(%arg0: i32, %arg1: i32, %arg2: memref<256x128xf32, #tpu.memory_space<vmem>>, %arg3: memref<8x128xf32, #tpu.memory_space<vmem>>, %arg4: memref<8x128xf32, #tpu.memory_space<vmem>>, %arg5: memref<256x128xf32, #tpu.memory_space<vmem>>) attributes {dimension_semantics = [#tpu.dimension_semantics<parallel>, #tpu.dimension_semantics<parallel>], iteration_bounds = array<i64: 2, 1>, scalar_prefetch = 0 : i64, scratch_operands = 0 : i64, tpu.core_type = #tpu.core_type<tc>, window_params = [{transform_indices = @transform_0, window_bounds = array<i64: 256, 128>}, {transform_indices = @transform_1, window_bounds = array<i64: 8, 128>}, {transform_indices = @transform_2, window_bounds = array<i64: 8, 128>}, {transform_indices = @transform_3, window_bounds = array<i64: 256, 128>}]} {
    %c0 = arith.constant 0 : index
    %c0_0 = arith.constant 0 : index
    %0 = vector.load %arg2[%c0, %c0_0] : memref<256x128xf32, #tpu.memory_space<vmem>>, vector<256x128xf32>
    %c0_1 = arith.constant 0 : index
    %c0_2 = arith.constant 0 : index
    %1 = vector.load %arg3[%c0_1, %c0_2] : memref<8x128xf32, #tpu.memory_space<vmem>>, vector<1x128xf32>
    %2 = vector.broadcast %1 : vector<1x128xf32> to vector<256x128xf32>
    %3 = arith.mulf %0, %2 : vector<256x128xf32>
    %c0_3 = arith.constant 0 : index
    %c0_4 = arith.constant 0 : index
    %4 = vector.load %arg4[%c0_3, %c0_4] : memref<8x128xf32, #tpu.memory_space<vmem>>, vector<1x128xf32>
    %5 = vector.broadcast %4 : vector<1x128xf32> to vector<256x128xf32>
    %6 = arith.addf %3, %5 : vector<256x128xf32>
    %cst = arith.constant 0.000000e+00 : f32
    %7 = vector.broadcast %cst : f32 to vector<256x128xf32>
    %8 = arith.maximumf %6, %7 : vector<256x128xf32>
    %c0_5 = arith.constant 0 : index
    %c0_6 = arith.constant 0 : index
    %9 = vector.load %arg5[%c0_5, %c0_6] : memref<256x128xf32, #tpu.memory_space<vmem>>, vector<256x128xf32>
    tpu.vector_store %arg5[%c0_5, %c0_6], %8 {strides = array<i32>} : memref<256x128xf32, #tpu.memory_space<vmem>>, vector<256x128xf32>,
    return
  }
  func.func @transform_0(%arg0: i32, %arg1: i32) -> (i32, i32) {
    %c0_i32 = arith.constant 0 : i32
    return %arg0, %arg1 : i32, i32
  }
  func.func @transform_1(%arg0: i32, %arg1: i32) -> (i32, i32) {
    %c0_i32 = arith.constant 0 : i32
    %c0_i32_0 = arith.constant 0 : i32
    return %c0_i32, %arg1 : i32, i32
  }
  func.func @transform_2(%arg0: i32, %arg1: i32) -> (i32, i32) {
    %c0_i32 = arith.constant 0 : i32
    %c0_i32_0 = arith.constant 0 : i32
    return %c0_i32, %arg1 : i32, i32
  }
  func.func @transform_3(%arg0: i32, %arg1: i32) -> (i32, i32) {
    %c0_i32 = arith.constant 0 : i32
    return %arg0, %arg1 : i32, i32
  }
}

</mosaic_0001>

<llo_original>
// kernel: conv_block.3
$region0: #{conv_block.3}
  #allocation0 [shape = 'u32[]', space=smem, size = 0x4, offset = 0x4, fixed_abs, tag = 'smem constant byte address 0x4 - core index']
  #allocation1 [shape = 'u32[72,128]{1,0:T(1,128)}', space=vmem, size = 0x9000, scoped, tag = 'internal scratch']
  %s0 = inlined_call_operand.vmem [shape: f32[512,128], index: 0, kind: input, shape index: {}]
  %s1 = inlined_call_operand.vmem [shape: f32[8,128], index: 1, kind: input, shape index: {}]
  %s2 = inlined_call_operand.vmem [shape: f32[8,128], index: 2, kind: input, shape index: {}]
  %s3 = inlined_call_operand.vmem [shape: f32[512,128], index: 3, kind: output, shape index: {}]
  %s4 = sld [smem:[#allocation0]]
  $region45: #{conv_block.3} parent=0
    _
  %s6 = ssub.s32 1, %s4
  %s7 = scalar_select 0, %s6, %s4
  loop: start=0, step=1, limit=4
  $region2: #{conv_block.3} parent=0 // loop_pre_header
    _
  $region3: #{conv_block.3} parent=0 // loop_header
    %s9 = sphi 0, %s13
    %p10 = scmp.ge.s32.totalorder %s9, 4
    %s16 = sphi 0, %s28
    %s17 = sphi 0, %s24
    %s18 = sphi 0, %s16
    %s19 = sphi 0, %s17
    %s20 = sphi 0, %s18
    %s21 = sphi 0, %s19
    %s33 = sphi 0, %s35
    %s36 = sphi 0, %s33
    %s37 = sphi 0, %s36
    %s53 = sphi 0, %s37
    %s59 = sphi 0, %s61
    %s62 = sphi 0, %s59
    %s63 = sphi 0, %s62
    %s79 = sphi 0, %s63
    %s85 = sphi 0, %s87
    %s88 = sphi 0, %s85
    %s89 = sphi 0, %s88
    %s105 = sphi 0, %s89
    %s113 = sphi 0, %s115
    %s116 = sphi 0, %s113
    %s117 = sphi 0, %s116
    %s133 = sphi 0, %s117
  $region4: #{conv_block.3} parent=0 // loop_header_branch
    %12 = sbr.rel (%p10) target = $region8
  $region5: #{conv_block.3} parent=0 // loop_body
    %s14 = ssub.s32 %s9, 1
    %s15 = ssub.s32 %s9, 2
    %s22 = sadd.s32 1, %s17
    %p23 = scmp.ge.s32.totalorder %s22, 1
    %s24 = scalar_select %p23, 0, %s22
    %s25 = sadd.s32 1, %s16
    %s26 = scalar_select %p23, %s25, %s16
    %p27 = scmp.ge.s32.totalorder %s26, 2
    %s28 = scalar_select %p27, 0, %s26
    %s29 = ssub.s32 %s16, %s28
    %s30 = ssub.s32 %s17, %s24
    %s31 = sor.u32 %s29, %s30
    %p32 = scmp.eq.s32.totalorder %s31, 0
    %s34 = sadd.s32 %s33, 1
    %s35 = scalar_select %p32, %s33, %s34
    %p38 = pneg %p32
    %p39 = scmp.eq.s32.totalorder %s9, 1
    %p40 = por %p38, %p39
    %p41 = scmp.ne.s32.totalorder %s33, %s36
    %p42 = scmp.eq.s32.totalorder %s9, 0
    %p43 = por %p41, %p42
    %p44 = scmp.ne.s32.totalorder %s33, %s36
    %p45 = scmp.eq.s32.totalorder %s14, 1
    %p46 = por %p44, %p45
    %p47 = scmp.ne.s32.totalorder %s36, %s37
    %p48 = scmp.eq.s32.totalorder %s14, 0
    %p49 = por %p47, %p48
    %p50 = scmp.ne.s32.totalorder %s36, %s37
    %p51 = scmp.eq.s32.totalorder %s15, 1
    %p52 = por %p50, %p51
    %p54 = scmp.ne.s32.totalorder %s37, %s53
    %p55 = scmp.eq.s32.totalorder %s15, 0
    %p56 = por %p54, %p55
    %s57 = ssub.s32 %s17, %s24
    %p58 = scmp.eq.s32.totalorder %s57, 0
    %s60 = sadd.s32 %s59, 1
    %s61 = scalar_select %p58, %s59, %s60
    %p64 = pneg %p58
    %p65 = scmp.eq.s32.totalorder %s9, 1
    %p66 = por %p64, %p65
    %p67 = scmp.ne.s32.totalorder %s59, %s62
    %p68 = scmp.eq.s32.totalorder %s9, 0
    %p69 = por %p67, %p68
    %p70 = scmp.ne.s32.totalorder %s59, %s62
    %p71 = scmp.eq.s32.totalorder %s14, 1
    %p72 = por %p70, %p71
    %p73 = scmp.ne.s32.totalorder %s62, %s63
    %p74 = scmp.eq.s32.totalorder %s14, 0
    %p75 = por %p73, %p74
    %p76 = scmp.ne.s32.totalorder %s62, %s63
    %p77 = scmp.eq.s32.totalorder %s15, 1
    %p78 = por %p76, %p77
    %p80 = scmp.ne.s32.totalorder %s63, %s79
    %p81 = scmp.eq.s32.totalorder %s15, 0
    %p82 = por %p80, %p81
    %s83 = ssub.s32 %s17, %s24
    %p84 = scmp.eq.s32.totalorder %s83, 0
    %s86 = sadd.s32 %s85, 1
    %s87 = scalar_select %p84, %s85, %s86
    %p90 = pneg %p84
    %p91 = scmp.eq.s32.totalorder %s9, 1
    %p92 = por %p90, %p91
    %p93 = scmp.ne.s32.totalorder %s85, %s88
    %p94 = scmp.eq.s32.totalorder %s9, 0
    %p95 = por %p93, %p94
    %p96 = scmp.ne.s32.totalorder %s85, %s88
    %p97 = scmp.eq.s32.totalorder %s14, 1
    %p98 = por %p96, %p97
    %p99 = scmp.ne.s32.totalorder %s88, %s89
    %p100 = scmp.eq.s32.totalorder %s14, 0
    %p101 = por %p99, %p100
    %p102 = scmp.ne.s32.totalorder %s88, %s89
    %p103 = scmp.eq.s32.totalorder %s15, 1
    %p104 = por %p102, %p103
    %p106 = scmp.ne.s32.totalorder %s89, %s105
    %p107 = scmp.eq.s32.totalorder %s15, 0
    %p108 = por %p106, %p107
    %s109 = ssub.s32 %s16, %s28
    %s110 = ssub.s32 %s17, %s24
    %s111 = sor.u32 %s109, %s110
    %p112 = scmp.eq.s32.totalorder %s111, 0
    %s114 = sadd.s32 %s113, 1
    %s115 = scalar_select %p112, %s113, %s114
    %p118 = pneg %p112
    %p119 = scmp.eq.s32.totalorder %s9, 1
    %p120 = por %p118, %p119
    %p121 = scmp.ne.s32.totalorder %s113, %s116
    %p122 = scmp.eq.s32.totalorder %s9, 0
    %p123 = por %p121, %p122
    %p124 = scmp.ne.s32.totalorder %s113, %s116
    %p125 = scmp.eq.s32.totalorder %s14, 1
    %p126 = por %p124, %p125
    %p127 = scmp.ne.s32.totalorder %s116, %s117
    %p128 = scmp.eq.s32.totalorder %s14, 0
    %p129 = por %p127, %p128
    %p130 = scmp.ne.s32.totalorder %s116, %s117
    %p131 = scmp.eq.s32.totalorder %s15, 1
    %p132 = por %p130, %p131
    %p134 = scmp.ne.s32.totalorder %s117, %s133
    %p135 = scmp.eq.s32.totalorder %s15, 0
    %p136 = por %p134, %p135
    %p137 = scmp.le.s32.totalorder 1, %s9
    %p138 = scmp.lt.s32.totalorder %s9, 3
    %p139 = pnand %p137, %p138
    %p140 = pneg %p139
    // Predicated region
    $region9: #{conv_block.3} parent=5 // pred_check
      _
    $region10: #{conv_block.3} parent=5 // pred_check_branch
      %142 = sbr.rel (%p139) target = $region12
    $region11: #{conv_block.3} parent=5 // pred_region
      %s143 = ssub.s32 %s9, 1
      // Predicated region
      $region13: #{conv_block.3} parent=11 // pred_check
        %p144 = pneg %p75
      $region14: #{conv_block.3} parent=11 // pred_check_branch
        %146 = sbr.rel (%p144) target = $region16
      $region15: #{conv_block.3} parent=11 // pred_region
        %p147 = scmp.lt.s32.totalorder %s19, 0
        %s148 = scalar_select %p147, %s19, 0
        %s149 = smul.addr %s148, 8
        %s150 = scalar_lea.vmem %s1, %s149
      $region16: #{conv_block.3} parent=11 // pred_fallthru
        _
      // Predicated region
      $region17: #{conv_block.3} parent=11 // pred_check
        %p151 = pneg %p101
      $region18: #{conv_block.3} parent=11 // pred_check_branch
        %153 = sbr.rel (%p151) target = $region20
      $region19: #{conv_block.3} parent=11 // pred_region
        %p154 = scmp.lt.s32.totalorder %s19, 0
        %s155 = scalar_select %p154, %s19, 0
        %s156 = smul.addr %s155, 8
        %s157 = scalar_lea.vmem %s2, %s156
      $region20: #{conv_block.3} parent=11 // pred_fallthru
        _
    $region12: #{conv_block.3} parent=5 // pred_fallthru
      _
    %p158 = scmp.lt.s32.totalorder %s9, 2
    // Predicated region
    $region21: #{conv_block.3} parent=5 // pred_check
      %p159 = pneg %p158
    $region22: #{conv_block.3} parent=5 // pred_check_branch
      %161 = sbr.rel (%p159) target = $region24
    $region23: #{conv_block.3} parent=5 // pred_region
      // Predicated region
      $region25: #{conv_block.3} parent=23 // pred_check
        %p162 = pneg %p43
      $region26: #{conv_block.3} parent=23 // pred_check_branch
        %164 = sbr.rel (%p162) target = $region28
      $region27: #{conv_block.3} parent=23 // pred_region
        %s165 = smul.u32 32, %s16
        %p166 = scmp.lt.s32.totalorder %s165, 63
        %s167 = scalar_select %p166, %s165, 63
        %p168 = scmp.lt.s32.totalorder %s17, 0
        %s169 = scalar_select %p168, %s17, 0
        %s170 = sadd.s32 %s169, %s167
        %s171 = smul.addr %s170, 8
        %s172 = scalar_lea.vmem %s0, %s171
        %s173 = smul.u32 32, %s16
      $region28: #{conv_block.3} parent=23 // pred_fallthru
        _
    $region24: #{conv_block.3} parent=5 // pred_fallthru
      _
    %p174 = scmp.le.s32.totalorder 1, %s9
    %p175 = scmp.lt.s32.totalorder %s9, 3
    %p176 = pnand %p174, %p175
    %p177 = pneg %p176
    // Predicated region
    $region29: #{conv_block.3} parent=5 // pred_check
      _
    $region30: #{conv_block.3} parent=5 // pred_check_branch
      %179 = sbr.rel (%p176) target = $region32
    $region31: #{conv_block.3} parent=5 // pred_region
      %s180 = ssub.s32 %s9, 1
      %s181 = smul.u32 32, %s18
      %p182 = scmp.lt.s32.totalorder %s181, 63
      %s183 = scalar_select %p182, %s181, 63
      %p184 = scmp.lt.s32.totalorder %s19, 0
      %s185 = scalar_select %p184, %s19, 0
      %s186 = sadd.s32 %s185, %s183
      %s187 = smul.addr %s186, 8
      %s188 = scalar_lea.vmem %s0, %s187
      %p189 = pneg %p49
      %p190 = pneg %p46
      %p191 = scmp.lt.s32.totalorder %s19, 0
      %s192 = scalar_select %p191, %s19, 0
      %s193 = smul.addr %s192, 8
      %s194 = scalar_lea.vmem %s1, %s193
      %p195 = pneg %p75
      %p196 = pneg %p72
      %p197 = scmp.lt.s32.totalorder %s19, 0
      %s198 = scalar_select %p197, %s19, 0
      %s199 = smul.addr %s198, 8
      %s200 = scalar_lea.vmem %s2, %s199
      %p201 = pneg %p101
      %p202 = pneg %p98
      %p203 = pneg %p129
      %p204 = pneg %p126
      %s205 = smul.u32 32, %s18
      %p206 = scmp.lt.s32.totalorder %s205, 63
      %s207 = scalar_select %p206, %s205, 63
      %p208 = scmp.lt.s32.totalorder %s19, 0
      %s209 = scalar_select %p208, %s19, 0
      %s210 = sadd.s32 %s209, %s207
      %s211 = smul.addr %s210, 8
      %s212 = scalar_lea.vmem %s3, %s211
      %s213 = smul.u32 32, %s18
      %p214 = scmp.lt.s32.totalorder %s213, 63
      %s215 = scalar_select %p214, %s213, 63
      %p216 = scmp.lt.s32.totalorder %s19, 0
      %s217 = scalar_select %p216, %s19, 0
      %s218 = sadd.s32 %s217, %s215
      %s219 = smul.addr %s218, 8
      %s220 = scalar_lea.vmem %s0, %s219
      %s221 = smul.u32 32, %s18
      %p222 = scmp.lt.s32.totalorder %s19, 0
      %s223 = scalar_select %p222, %s19, 0
      %s224 = smul.addr %s223, 8
      %s225 = scalar_lea.vmem %s1, %s224
      %p226 = scmp.lt.s32.totalorder %s19, 0
      %s227 = scalar_select %p226, %s19, 0
      %s228 = smul.addr %s227, 8
      %s229 = scalar_lea.vmem %s2, %s228
      %s230 = smul.u32 32, %s18
      %p231 = scmp.lt.s32.totalorder %s230, 63
      %s232 = scalar_select %p231, %s230, 63
      %p233 = scmp.lt.s32.totalorder %s19, 0
      %s234 = scalar_select %p233, %s19, 0
      %s235 = sadd.s32 %s234, %s232
      %s236 = smul.addr %s235, 8
      %s237 = scalar_lea.vmem %s3, %s236
      %s238 = smul.u32 32, %s18
      %v239 = vld [vmem:[%s220] sm:$0xff]
      %v240 = vld [vmem:[%s220 + $0x8] sm:$0xff]
      %v241 = vld [vmem:[%s220 + $0x10] sm:$0xff]
      %v242 = vld [vmem:[%s220 + $0x18] sm:$0xff]
      %v243 = vld [vmem:[%s220 + $0x20] sm:$0xff]
      %v244 = vld [vmem:[%s220 + $0x28] sm:$0xff]
      %v245 = vld [vmem:[%s220 + $0x30] sm:$0xff]
      %v246 = vld [vmem:[%s220 + $0x38] sm:$0xff]
      %v247 = vld [vmem:[%s220 + $0x40] sm:$0xff]
      %v248 = vld [vmem:[%s220 + $0x48] sm:$0xff]
      %v249 = vld [vmem:[%s220 + $0x50] sm:$0xff]
      %v250 = vld [vmem:[%s220 + $0x58] sm:$0xff]
      %v251 = vld [vmem:[%s220 + $0x60] sm:$0xff]
      %v252 = vld [vmem:[%s220 + $0x68] sm:$0xff]
      %v253 = vld [vmem:[%s220 + $0x70] sm:$0xff]
      %v254 = vld [vmem:[%s220 + $0x78] sm:$0xff]
      %v255 = vld [vmem:[%s220 + $0x80] sm:$0xff]
      %v256 = vld [vmem:[%s220 + $0x88] sm:$0xff]
      %v257 = vld [vmem:[%s220 + $0x90] sm:$0xff]
      %v258 = vld [vmem:[%s220 + $0x98] sm:$0xff]
      %v259 = vld [vmem:[%s220 + $0xa0] sm:$0xff]
      %v260 = vld [vmem:[%s220 + $0xa8] sm:$0xff]
      %v261 = vld [vmem:[%s220 + $0xb0] sm:$0xff]
      %v262 = vld [vmem:[%s220 + $0xb8] sm:$0xff]
      %v263 = vld [vmem:[%s220 + $0xc0] sm:$0xff]
      %v264 = vld [vmem:[%s220 + $0xc8] sm:$0xff]
      %v265 = vld [vmem:[%s220 + $0xd0] sm:$0xff]
      %v266 = vld [vmem:[%s220 + $0xd8] sm:$0xff]
      %v267 = vld [vmem:[%s220 + $0xe0] sm:$0xff]
      %v268 = vld [vmem:[%s220 + $0xe8] sm:$0xff]
      %v269 = vld [vmem:[%s220 + $0xf0] sm:$0xff]
      %v270 = vld [vmem:[%s220 + $0xf8] sm:$0xff]
      %v271 = vld [vmem:[%s225] sm:$0x1]
      %v272 = vperm.slane %v271, 0
      %v273 = vmul.f32 %v239, %v272
      %v274 = vmul.f32 %v240, %v272
      %v275 = vmul.f32 %v241, %v272
      %v276 = vmul.f32 %v242, %v272
      %v277 = vmul.f32 %v243, %v272
      %v278 = vmul.f32 %v244, %v272
      %v279 = vmul.f32 %v245, %v272
      %v280 = vmul.f32 %v246, %v272
      %v281 = vmul.f32 %v247, %v272
      %v282 = vmul.f32 %v248, %v272
      %v283 = vmul.f32 %v249, %v272
      %v284 = vmul.f32 %v250, %v272
      %v285 = vmul.f32 %v251, %v272
      %v286 = vmul.f32 %v252, %v272
      %v287 = vmul.f32 %v253, %v272
      %v288 = vmul.f32 %v254, %v272
      %v289 = vmul.f32 %v255, %v272
      %v290 = vmul.f32 %v256, %v272
      %v291 = vmul.f32 %v257, %v272
      %v292 = vmul.f32 %v258, %v272
      %v293 = vmul.f32 %v259, %v272
      %v294 = vmul.f32 %v260, %v272
      %v295 = vmul.f32 %v261, %v272
      %v296 = vmul.f32 %v262, %v272
      %v297 = vmul.f32 %v263, %v272
      %v298 = vmul.f32 %v264, %v272
      %v299 = vmul.f32 %v265, %v272
      %v300 = vmul.f32 %v266, %v272
      %v301 = vmul.f32 %v267, %v272
      %v302 = vmul.f32 %v268, %v272
      %v303 = vmul.f32 %v269, %v272
      %v304 = vmul.f32 %v270, %v272
      %v305 = vld [vmem:[%s229] sm:$0x1]
      %v306 = vperm.slane %v305, 0
      %v307 = vadd.f32 %v273, %v306
      %v308 = vadd.f32 %v274, %v306
      %v309 = vadd.f32 %v275, %v306
      %v310 = vadd.f32 %v276, %v306
      %v311 = vadd.f32 %v277, %v306
      %v312 = vadd.f32 %v278, %v306
      %v313 = vadd.f32 %v279, %v306
      %v314 = vadd.f32 %v280, %v306
      %v315 = vadd.f32 %v281, %v306
      %v316 = vadd.f32 %v282, %v306
      %v317 = vadd.f32 %v283, %v306
      %v318 = vadd.f32 %v284, %v306
      %v319 = vadd.f32 %v285, %v306
      %v320 = vadd.f32 %v286, %v306
      %v321 = vadd.f32 %v287, %v306
      %v322 = vadd.f32 %v288, %v306
      %v323 = vadd.f32 %v289, %v306
      %v324 = vadd.f32 %v290, %v306
      %v325 = vadd.f32 %v291, %v306
      %v326 = vadd.f32 %v292, %v306
      %v327 = vadd.f32 %v293, %v306
      %v328 = vadd.f32 %v294, %v306
      %v329 = vadd.f32 %v295, %v306
      %v330 = vadd.f32 %v296, %v306
      %v331 = vadd.f32 %v297, %v306
      %v332 = vadd.f32 %v298, %v306
      %v333 = vadd.f32 %v299, %v306
      %v334 = vadd.f32 %v300, %v306
      %v335 = vadd.f32 %v301, %v306
      %v336 = vadd.f32 %v302, %v306
      %v337 = vadd.f32 %v303, %v306
      %v338 = vadd.f32 %v304, %v306
      %v339 = vmax.f32 %v307, 0.0
      %v340 = vmax.f32 %v308, 0.0
      %v341 = vmax.f32 %v309, 0.0
      %v342 = vmax.f32 %v310, 0.0
      %v343 = vmax.f32 %v311, 0.0
      %v344 = vmax.f32 %v312, 0.0
      %v345 = vmax.f32 %v313, 0.0
      %v346 = vmax.f32 %v314, 0.0
      %v347 = vmax.f32 %v315, 0.0
      %v348 = vmax.f32 %v316, 0.0
      %v349 = vmax.f32 %v317, 0.0
      %v350 = vmax.f32 %v318, 0.0
      %v351 = vmax.f32 %v319, 0.0
      %v352 = vmax.f32 %v320, 0.0
      %v353 = vmax.f32 %v321, 0.0
      %v354 = vmax.f32 %v322, 0.0
      %v355 = vmax.f32 %v323, 0.0
      %v356 = vmax.f32 %v324, 0.0
      %v357 = vmax.f32 %v325, 0.0
      %v358 = vmax.f32 %v326, 0.0
      %v359 = vmax.f32 %v327, 0.0
      %v360 = vmax.f32 %v328, 0.0
      %v361 = vmax.f32 %v329, 0.0
      %v362 = vmax.f32 %v330, 0.0
      %v363 = vmax.f32 %v331, 0.0
      %v364 = vmax.f32 %v332, 0.0
      %v365 = vmax.f32 %v333, 0.0
      %v366 = vmax.f32 %v334, 0.0
      %v367 = vmax.f32 %v335, 0.0
      %v368 = vmax.f32 %v336, 0.0
      %v369 = vmax.f32 %v337, 0.0
      %v370 = vmax.f32 %v338, 0.0
      %371 = vst [vmem:[%s237] sm:$0xff] %v339
      %372 = vst [vmem:[%s237 + $0x8] sm:$0xff] %v340
      %373 = vst [vmem:[%s237 + $0x10] sm:$0xff] %v341
      %374 = vst [vmem:[%s237 + $0x18] sm:$0xff] %v342
      %375 = vst [vmem:[%s237 + $0x20] sm:$0xff] %v343
      %376 = vst [vmem:[%s237 + $0x28] sm:$0xff] %v344
      %377 = vst [vmem:[%s237 + $0x30] sm:$0xff] %v345
      %378 = vst [vmem:[%s237 + $0x38] sm:$0xff] %v346
      %379 = vst [vmem:[%s237 + $0x40] sm:$0xff] %v347
      %380 = vst [vmem:[%s237 + $0x48] sm:$0xff] %v348
      %381 = vst [vmem:[%s237 + $0x50] sm:$0xff] %v349
      %382 = vst [vmem:[%s237 + $0x58] sm:$0xff] %v350
      %383 = vst [vmem:[%s237 + $0x60] sm:$0xff] %v351
      %384 = vst [vmem:[%s237 + $0x68] sm:$0xff] %v352
      %385 = vst [vmem:[%s237 + $0x70] sm:$0xff] %v353
      %386 = vst [vmem:[%s237 + $0x78] sm:$0xff] %v354
      %387 = vst [vmem:[%s237 + $0x80] sm:$0xff] %v355
      %388 = vst [vmem:[%s237 + $0x88] sm:$0xff] %v356
      %389 = vst [vmem:[%s237 + $0x90] sm:$0xff] %v357
      %390 = vst [vmem:[%s237 + $0x98] sm:$0xff] %v358
      %391 = vst [vmem:[%s237 + $0xa0] sm:$0xff] %v359
      %392 = vst [vmem:[%s237 + $0xa8] sm:$0xff] %v360
      %393 = vst [vmem:[%s237 + $0xb0] sm:$0xff] %v361
      %394 = vst [vmem:[%s237 + $0xb8] sm:$0xff] %v362
      %395 = vst [vmem:[%s237 + $0xc0] sm:$0xff] %v363
      %396 = vst [vmem:[%s237 + $0xc8] sm:$0xff] %v364
      %397 = vst [vmem:[%s237 + $0xd0] sm:$0xff] %v365
      %398 = vst [vmem:[%s237 + $0xd8] sm:$0xff] %v366
      %399 = vst [vmem:[%s237 + $0xe0] sm:$0xff] %v367
      %400 = vst [vmem:[%s237 + $0xe8] sm:$0xff] %v368
      %401 = vst [vmem:[%s237 + $0xf0] sm:$0xff] %v369
      %402 = vst [vmem:[%s237 + $0xf8] sm:$0xff] %v370
      %s403 = smul.u32 32, %s18
      %p404 = scmp.lt.s32.totalorder %s403, 63
      %s405 = scalar_select %p404, %s403, 63
      %p406 = scmp.lt.s32.totalorder %s19, 0
      %s407 = scalar_select %p406, %s19, 0
      %s408 = sadd.s32 %s407, %s405
      %s409 = smul.addr %s408, 8
      %s410 = scalar_lea.vmem %s3, %s409
      // Predicated region
      $region33: #{conv_block.3} parent=31 // pred_check
        %p411 = pneg %p126
      $region34: #{conv_block.3} parent=31 // pred_check_branch
        %413 = sbr.rel (%p411) target = $region36
      $region35: #{conv_block.3} parent=31 // pred_region
        %s414 = smul.u32 32, %s18
      $region36: #{conv_block.3} parent=31 // pred_fallthru
        _
    $region32: #{conv_block.3} parent=5 // pred_fallthru
      _
    %p415 = scmp.le.s32.totalorder 2, %s9
    // Predicated region
    $region37: #{conv_block.3} parent=5 // pred_check
      %p416 = pneg %p415
    $region38: #{conv_block.3} parent=5 // pred_check_branch
      %418 = sbr.rel (%p416) target = $region40
    $region39: #{conv_block.3} parent=5 // pred_region
      %s419 = ssub.s32 %s9, 2
      // Predicated region
      $region41: #{conv_block.3} parent=39 // pred_check
        %p420 = pneg %p132
      $region42: #{conv_block.3} parent=39 // pred_check_branch
        %422 = sbr.rel (%p420) target = $region44
      $region43: #{conv_block.3} parent=39 // pred_region
        %s423 = smul.u32 32, %s20
        %p424 = scmp.lt.s32.totalorder %s423, 63
        %s425 = scalar_select %p424, %s423, 63
        %p426 = scmp.lt.s32.totalorder %s21, 0
        %s427 = scalar_select %p426, %s21, 0
        %s428 = sadd.s32 %s427, %s425
        %s429 = smul.addr %s428, 8
        %s430 = scalar_lea.vmem %s3, %s429
      $region44: #{conv_block.3} parent=39 // pred_fallthru
        _
    $region40: #{conv_block.3} parent=5 // pred_fallthru
      _
  $region6: #{conv_block.3} parent=0 // loop_footer
    %s13 = sadd.s32 1, %s9
  $region7: #{conv_block.3} parent=0 // loop_footer_branch
    %8 = sbr.rel target = $region3
  $region8: #{conv_block.3} parent=0 // loop_exit
    _

// kernel: conv_block.2
$region0: #{conv_block.2}
  #allocation0 [shape = 'u32[]', space=smem, size = 0x4, offset = 0x4, fixed_abs, tag = 'smem constant byte address 0x4 - core index']
  #allocation1 [shape = 'u32[72,128]{1,0:T(1,128)}', space=vmem, size = 0x9000, scoped, tag = 'internal scratch']
  #allocation2 [shape = 'f32[256,128]{1,0:T(8,128)}', space=vmem, size = 0x20000, scoped, tag = 'scratch operand']
  %s0 = inlined_call_operand.vmem [shape: f32[512,128], index: 0, kind: input, shape index: {}]
  %s1 = inlined_call_operand.vmem [shape: f32[128,128], index: 1, kind: input, shape index: {}]
  %s2 = inlined_call_operand.vmem [shape: f32[512,128], index: 2, kind: output, shape index: {0}]
  %s3 = inlined_call_operand.vmem [shape: f32[16,128], index: 3, kind: output, shape index: {1}]
  %4 = xla_tuple %s2, %s3
  %s5 = sld [smem:[#allocation0]]
  $region57: #{conv_block.2} parent=0
    _
  %s7 = ssub.s32 1, %s5
  %s8 = scalar_select 0, %s7, %s5
  loop: start=0, step=1, limit=4
  $region2: #{conv_block.2} parent=0 // loop_pre_header
    _
  $region3: #{conv_block.2} parent=0 // loop_header
    %s10 = sphi 0, %s14
    %p11 = scmp.ge.s32.totalorder %s10, 4
    %s17 = sphi 0, %s36
    %s18 = sphi 0, %s32
    %s19 = sphi 0, %s28
    %s20 = sphi 0, %s17
    %s21 = sphi 0, %s18
    %s22 = sphi 0, %s19
    %s23 = sphi 0, %s20
    %s24 = sphi 0, %s21
    %s25 = sphi 0, %s22
    %s41 = sphi 0, %s43
    %s44 = sphi 0, %s41
    %s45 = sphi 0, %s44
    %s61 = sphi 0, %s45
    %s69 = sphi 0, %s71
    %s72 = sphi 0, %s69
    %s73 = sphi 0, %s72
    %s89 = sphi 0, %s73
    %s97 = sphi 0, %s99
    %s100 = sphi 0, %s97
    %s101 = sphi 0, %s100
    %s117 = sphi 0, %s101
    %s125 = sphi 0, %s127
    %s128 = sphi 0, %s125
    %s129 = sphi 0, %s128
    %s145 = sphi 0, %s129
  $region4: #{conv_block.2} parent=0 // loop_header_branch
    %13 = sbr.rel (%p11) target = $region8
  $region5: #{conv_block.2} parent=0 // loop_body
    %s15 = ssub.s32 %s10, 1
    %s16 = ssub.s32 %s10, 2
    %s26 = sadd.s32 1, %s19
    %p27 = scmp.ge.s32.totalorder %s26, 1
    %s28 = scalar_select %p27, 0, %s26
    %s29 = sadd.s32 1, %s18
    %s30 = scalar_select %p27, %s29, %s18
    %p31 = scmp.ge.s32.totalorder %s30, 1
    %s32 = scalar_select %p31, 0, %s30
    %s33 = sadd.s32 1, %s17
    %s34 = scalar_select %p31, %s33, %s17
    %p35 = scmp.ge.s32.totalorder %s34, 2
    %s36 = scalar_select %p35, 0, %s34
    %s37 = ssub.s32 %s17, %s36
    %s38 = ssub.s32 %s19, %s28
    %s39 = sor.u32 %s37, %s38
    %p40 = scmp.eq.s32.totalorder %s39, 0
    %s42 = sadd.s32 %s41, 1
    %s43 = scalar_select %p40, %s41, %s42
    %p46 = pneg %p40
    %p47 = scmp.eq.s32.totalorder %s10, 1
    %p48 = por %p46, %p47
    %p49 = scmp.ne.s32.totalorder %s41, %s44
    %p50 = scmp.eq.s32.totalorder %s10, 0
    %p51 = por %p49, %p50
    %p52 = scmp.ne.s32.totalorder %s41, %s44
    %p53 = scmp.eq.s32.totalorder %s15, 1
    %p54 = por %p52, %p53
    %p55 = scmp.ne.s32.totalorder %s44, %s45
    %p56 = scmp.eq.s32.totalorder %s15, 0
    %p57 = por %p55, %p56
    %p58 = scmp.ne.s32.totalorder %s44, %s45
    %p59 = scmp.eq.s32.totalorder %s16, 1
    %p60 = por %p58, %p59
    %p62 = scmp.ne.s32.totalorder %s45, %s61
    %p63 = scmp.eq.s32.totalorder %s16, 0
    %p64 = por %p62, %p63
    %s65 = ssub.s32 %s19, %s28
    %s66 = ssub.s32 %s18, %s32
    %s67 = sor.u32 %s65, %s66
    %p68 = scmp.eq.s32.totalorder %s67, 0
    %s70 = sadd.s32 %s69, 1
    %s71 = scalar_select %p68, %s69, %s70
    %p74 = pneg %p68
    %p75 = scmp.eq.s32.totalorder %s10, 1
    %p76 = por %p74, %p75
    %p77 = scmp.ne.s32.totalorder %s69, %s72
    %p78 = scmp.eq.s32.totalorder %s10, 0
    %p79 = por %p77, %p78
    %p80 = scmp.ne.s32.totalorder %s69, %s72
    %p81 = scmp.eq.s32.totalorder %s15, 1
    %p82 = por %p80, %p81
    %p83 = scmp.ne.s32.totalorder %s72, %s73
    %p84 = scmp.eq.s32.totalorder %s15, 0
    %p85 = por %p83, %p84
    %p86 = scmp.ne.s32.totalorder %s72, %s73
    %p87 = scmp.eq.s32.totalorder %s16, 1
    %p88 = por %p86, %p87
    %p90 = scmp.ne.s32.totalorder %s73, %s89
    %p91 = scmp.eq.s32.totalorder %s16, 0
    %p92 = por %p90, %p91
    %s93 = ssub.s32 %s17, %s36
    %s94 = ssub.s32 %s18, %s32
    %s95 = sor.u32 %s93, %s94
    %p96 = scmp.eq.s32.totalorder %s95, 0
    %s98 = sadd.s32 %s97, 1
    %s99 = scalar_select %p96, %s97, %s98
    %p102 = pneg %p96
    %p103 = scmp.eq.s32.totalorder %s10, 1
    %p104 = por %p102, %p103
    %p105 = scmp.ne.s32.totalorder %s97, %s100
    %p106 = scmp.eq.s32.totalorder %s10, 0
    %p107 = por %p105, %p106
    %p108 = scmp.ne.s32.totalorder %s97, %s100
    %p109 = scmp.eq.s32.totalorder %s15, 1
    %p110 = por %p108, %p109
    %p111 = scmp.ne.s32.totalorder %s100, %s101
    %p112 = scmp.eq.s32.totalorder %s15, 0
    %p113 = por %p111, %p112
    %p114 = scmp.ne.s32.totalorder %s100, %s101
    %p115 = scmp.eq.s32.totalorder %s16, 1
    %p116 = por %p114, %p115
    %p118 = scmp.ne.s32.totalorder %s101, %s117
    %p119 = scmp.eq.s32.totalorder %s16, 0
    %p120 = por %p118, %p119
    %s121 = ssub.s32 %s17, %s36
    %s122 = ssub.s32 %s18, %s32
    %s123 = sor.u32 %s121, %s122
    %p124 = scmp.eq.s32.totalorder %s123, 0
    %s126 = sadd.s32 %s125, 1
    %s127 = scalar_select %p124, %s125, %s126
    %p130 = pneg %p124
    %p131 = scmp.eq.s32.totalorder %s10, 1
    %p132 = por %p130, %p131
    %p133 = scmp.ne.s32.totalorder %s125, %s128
    %p134 = scmp.eq.s32.totalorder %s10, 0
    %p135 = por %p133, %p134
    %p136 = scmp.ne.s32.totalorder %s125, %s128
    %p137 = scmp.eq.s32.totalorder %s15, 1
    %p138 = por %p136, %p137
    %p139 = scmp.ne.s32.totalorder %s128, %s129
    %p140 = scmp.eq.s32.totalorder %s15, 0
    %p141 = por %p139, %p140
    %p142 = scmp.ne.s32.totalorder %s128, %s129
    %p143 = scmp.eq.s32.totalorder %s16, 1
    %p144 = por %p142, %p143
    %p146 = scmp.ne.s32.totalorder %s129, %s145
    %p147 = scmp.eq.s32.totalorder %s16, 0
    %p148 = por %p146, %p147
    %p149 = scmp.le.s32.totalorder 1, %s10
    %p150 = scmp.lt.s32.totalorder %s10, 3
    %p151 = pnand %p149, %p150
    %p152 = pneg %p151
    // Predicated region
    $region9: #{conv_block.2} parent=5 // pred_check
      _
    $region10: #{conv_block.2} parent=5 // pred_check_branch
      %154 = sbr.rel (%p151) target = $region12
    $region11: #{conv_block.2} parent=5 // pred_region
      %s155 = ssub.s32 %s10, 1
      // Predicated region
      $region13: #{conv_block.2} parent=11 // pred_check
        %p156 = pneg %p85
      $region14: #{conv_block.2} parent=11 // pred_check_branch
        %158 = sbr.rel (%p156) target = $region16
      $region15: #{conv_block.2} parent=11 // pred_region
        %s159 = smul.u32 16, %s22
        %p160 = scmp.lt.s32.totalorder %s159, 15
        %s161 = scalar_select %p160, %s159, 15
        %p162 = scmp.lt.s32.totalorder %s21, 0
        %s163 = scalar_select %p162, %s21, 0
        %s164 = sadd.s32 %s163, %s161
        %s165 = smul.addr %s164, 8
        %s166 = scalar_lea.vmem %s1, %s165
        %s167 = smul.u32 16, %s22
      $region16: #{conv_block.2} parent=11 // pred_fallthru
        _
    $region12: #{conv_block.2} parent=5 // pred_fallthru
      _
    %p168 = scmp.lt.s32.totalorder %s10, 2
    // Predicated region
    $region17: #{conv_block.2} parent=5 // pred_check
      %p169 = pneg %p168
    $region18: #{conv_block.2} parent=5 // pred_check_branch
      %171 = sbr.rel (%p169) target = $region20
    $region19: #{conv_block.2} parent=5 // pred_region
      // Predicated region
      $region21: #{conv_block.2} parent=19 // pred_check
        %p172 = pneg %p51
      $region22: #{conv_block.2} parent=19 // pred_check_branch
        %174 = sbr.rel (%p172) target = $region24
      $region23: #{conv_block.2} parent=19 // pred_region
        %s175 = smul.u32 32, %s17
        %p176 = scmp.lt.s32.totalorder %s175, 63
        %s177 = scalar_select %p176, %s175, 63
        %p178 = scmp.lt.s32.totalorder %s19, 0
        %s179 = scalar_select %p178, %s19, 0
        %s180 = sadd.s32 %s179, %s177
        %s181 = smul.addr %s180, 8
        %s182 = scalar_lea.vmem %s0, %s181
        %s183 = smul.u32 32, %s17
      $region24: #{conv_block.2} parent=19 // pred_fallthru
        _
    $region20: #{conv_block.2} parent=5 // pred_fallthru
      _
    %p184 = scmp.le.s32.totalorder 1, %s10
    %p185 = scmp.lt.s32.totalorder %s10, 3
    %p186 = pnand %p184, %p185
    %p187 = pneg %p186
    // Predicated region
    $region25: #{conv_block.2} parent=5 // pred_check
      _
    $region26: #{conv_block.2} parent=5 // pred_check_branch
      %189 = sbr.rel (%p186) target = $region28
    $region27: #{conv_block.2} parent=5 // pred_region
      %s190 = ssub.s32 %s10, 1
      %s191 = smul.u32 32, %s20
      %p192 = scmp.lt.s32.totalorder %s191, 63
      %s193 = scalar_select %p192, %s191, 63
      %p194 = scmp.lt.s32.totalorder %s22, 0
      %s195 = scalar_select %p194, %s22, 0
      %s196 = sadd.s32 %s195, %s193
      %s197 = smul.addr %s196, 8
      %s198 = scalar_lea.vmem %s0, %s197
      %p199 = pneg %p57
      %p200 = pneg %p54
      %s201 = smul.u32 16, %s22
      %p202 = scmp.lt.s32.totalorder %s201, 15
      %s203 = scalar_select %p202, %s201, 15
      %p204 = scmp.lt.s32.totalorder %s21, 0
      %s205 = scalar_select %p204, %s21, 0
      %s206 = sadd.s32 %s205, %s203
      %s207 = smul.addr %s206, 8
      %s208 = scalar_lea.vmem %s1, %s207
      %p209 = pneg %p85
      %p210 = pneg %p82
      %p211 = pneg %p113
      %p212 = pneg %p110
      %s213 = smul.u32 32, %s20
      %p214 = scmp.lt.s32.totalorder %s213, 63
      %s215 = scalar_select %p214, %s213, 63
      %p216 = scmp.lt.s32.totalorder %s21, 0
      %s217 = scalar_select %p216, %s21, 0
      %s218 = sadd.s32 %s217, %s215
      %s219 = smul.addr %s218, 8
      %s220 = scalar_lea.vmem %s2, %s219
      %p221 = pneg %p141
      %p222 = pneg %p138
      %p223 = scmp.lt.s32.totalorder %s20, 1
      %s224 = scalar_select %p223, %s20, 1
      %p225 = scmp.lt.s32.totalorder %s21, 0
      %s226 = scalar_select %p225, %s21, 0
      %s227 = sadd.s32 %s226, %s224
      %s228 = smul.addr %s227, 8
      %s229 = scalar_lea.vmem %s3, %s228
      %s230 = smul.u32 32, %s20
      %p231 = scmp.lt.s32.totalorder %s230, 63
      %s232 = scalar_select %p231, %s230, 63
      %p233 = scmp.lt.s32.totalorder %s22, 0
      %s234 = scalar_select %p233, %s22, 0
      %s235 = sadd.s32 %s234, %s232
      %s236 = smul.addr %s235, 8
      %s237 = scalar_lea.vmem %s0, %s236
      %s238 = smul.u32 32, %s20
      %s239 = smul.u32 16, %s22
      %p240 = scmp.lt.s32.totalorder %s239, 15
      %s241 = scalar_select %p240, %s239, 15
      %p242 = scmp.lt.s32.totalorder %s21, 0
      %s243 = scalar_select %p242, %s21, 0
      %s244 = sadd.s32 %s243, %s241
      %s245 = smul.addr %s244, 8
      %s246 = scalar_lea.vmem %s1, %s245
      %s247 = smul.u32 16, %s22
      %s248 = smul.u32 32, %s20
      %p249 = scmp.lt.s32.totalorder %s248, 63
      %s250 = scalar_select %p249, %s248, 63
      %p251 = scmp.lt.s32.totalorder %s21, 0
      %s252 = scalar_select %p251, %s21, 0
      %s253 = sadd.s32 %s252, %s250
      %s254 = smul.addr %s253, 8
      %s255 = scalar_lea.vmem %s2, %s254
      %s256 = smul.u32 32, %s20
      %p257 = scmp.lt.s32.totalorder %s20, 1
      %s258 = scalar_select %p257, %s20, 1
      %p259 = scmp.lt.s32.totalorder %s21, 0
      %s260 = scalar_select %p259, %s21, 0
      %s261 = sadd.s32 %s260, %s258
      %s262 = smul.addr %s261, 8
      %s263 = scalar_lea.vmem %s3, %s262
      %p264 = scmp.eq.s32.totalorder %s22, 0
      // Predicated region
      $region29: #{conv_block.2} parent=27 // pred_check
        %p265 = pneg %p264
      $region30: #{conv_block.2} parent=27 // pred_check_branch
        %267 = sbr.rel (%p265) target = $region32
      $region31: #{conv_block.2} parent=27 // pred_region
        %268 = vst [vmem:[#allocation2] sm:$0xff] 0.0
        %269 = vst [vmem:[#allocation2 + $0x8] sm:$0xff] 0.0
        %270 = vst [vmem:[#allocation2 + $0x10] sm:$0xff] 0.0
        %271 = vst [vmem:[#allocation2 + $0x18] sm:$0xff] 0.0
        %272 = vst [vmem:[#allocation2 + $0x20] sm:$0xff] 0.0
        %273 = vst [vmem:[#allocation2 + $0x28] sm:$0xff] 0.0
        %274 = vst [vmem:[#allocation2 + $0x30] sm:$0xff] 0.0
        %275 = vst [vmem:[#allocation2 + $0x38] sm:$0xff] 0.0
        %276 = vst [vmem:[#allocation2 + $0x40] sm:$0xff] 0.0
        %277 = vst [vmem:[#allocation2 + $0x48] sm:$0xff] 0.0
        %278 = vst [vmem:[#allocation2 + $0x50] sm:$0xff] 0.0
        %279 = vst [vmem:[#allocation2 + $0x58] sm:$0xff] 0.0
        %280 = vst [vmem:[#allocation2 + $0x60] sm:$0xff] 0.0
        %281 = vst [vmem:[#allocation2 + $0x68] sm:$0xff] 0.0
        %282 = vst [vmem:[#allocation2 + $0x70] sm:$0xff] 0.0
        %283 = vst [vmem:[#allocation2 + $0x78] sm:$0xff] 0.0
        %284 = vst [vmem:[#allocation2 + $0x80] sm:$0xff] 0.0
        %285 = vst [vmem:[#allocation2 + $0x88] sm:$0xff] 0.0
        %286 = vst [vmem:[#allocation2 + $0x90] sm:$0xff] 0.0
        %287 = vst [vmem:[#allocation2 + $0x98] sm:$0xff] 0.0
        %288 = vst [vmem:[#allocation2 + $0xa0] sm:$0xff] 0.0
        %289 = vst [vmem:[#allocation2 + $0xa8] sm:$0xff] 0.0
        %290 = vst [vmem:[#allocation2 + $0xb0] sm:$0xff] 0.0
        %291 = vst [vmem:[#allocation2 + $0xb8] sm:$0xff] 0.0
        %292 = vst [vmem:[#allocation2 + $0xc0] sm:$0xff] 0.0
        %293 = vst [vmem:[#allocation2 + $0xc8] sm:$0xff] 0.0
        %294 = vst [vmem:[#allocation2 + $0xd0] sm:$0xff] 0.0
        %295 = vst [vmem:[#allocation2 + $0xd8] sm:$0xff] 0.0
        %296 = vst [vmem:[#allocation2 + $0xe0] sm:$0xff] 0.0
        %297 = vst [vmem:[#allocation2 + $0xe8] sm:$0xff] 0.0
        %298 = vst [vmem:[#allocation2 + $0xf0] sm:$0xff] 0.0
        %299 = vst [vmem:[#allocation2 + $0xf8] sm:$0xff] 0.0
      $region32: #{conv_block.2} parent=27 // pred_fallthru
        _
      %v300 = vld [vmem:[#allocation2] sm:$0xff]
      %v301 = vld [vmem:[#allocation2 + $0x8] sm:$0xff]
      %v302 = vld [vmem:[#allocation2 + $0x10] sm:$0xff]
      %v303 = vld [vmem:[#allocation2 + $0x18] sm:$0xff]
      %v304 = vld [vmem:[#allocation2 + $0x20] sm:$0xff]
      %v305 = vld [vmem:[#allocation2 + $0x28] sm:$0xff]
      %v306 = vld [vmem:[#allocation2 + $0x30] sm:$0xff]
      %v307 = vld [vmem:[#allocation2 + $0x38] sm:$0xff]
      %v308 = vld [vmem:[#allocation2 + $0x40] sm:$0xff]
      %v309 = vld [vmem:[#allocation2 + $0x48] sm:$0xff]
      %v310 = vld [vmem:[#allocation2 + $0x50] sm:$0xff]
      %v311 = vld [vmem:[#allocation2 + $0x58] sm:$0xff]
      %v312 = vld [vmem:[#allocation2 + $0x60] sm:$0xff]
      %v313 = vld [vmem:[#allocation2 + $0x68] sm:$0xff]
      %v314 = vld [vmem:[#allocation2 + $0x70] sm:$0xff]
      %v315 = vld [vmem:[#allocation2 + $0x78] sm:$0xff]
      %v316 = vld [vmem:[#allocation2 + $0x80] sm:$0xff]
      %v317 = vld [vmem:[#allocation2 + $0x88] sm:$0xff]
      %v318 = vld [vmem:[#allocation2 + $0x90] sm:$0xff]
      %v319 = vld [vmem:[#allocation2 + $0x98] sm:$0xff]
      %v320 = vld [vmem:[#allocation2 + $0xa0] sm:$0xff]
      %v321 = vld [vmem:[#allocation2 + $0xa8] sm:$0xff]
      %v322 = vld [vmem:[#allocation2 + $0xb0] sm:$0xff]
      %v323 = vld [vmem:[#allocation2 + $0xb8] sm:$0xff]
      %v324 = vld [vmem:[#allocation2 + $0xc0] sm:$0xff]
      %v325 = vld [vmem:[#allocation2 + $0xc8] sm:$0xff]
      %v326 = vld [vmem:[#allocation2 + $0xd0] sm:$0xff]
      %v327 = vld [vmem:[#allocation2 + $0xd8] sm:$0xff]
      %v328 = vld [vmem:[#allocation2 + $0xe0] sm:$0xff]
      %v329 = vld [vmem:[#allocation2 + $0xe8] sm:$0xff]
      %v330 = vld [vmem:[#allocation2 + $0xf0] sm:$0xff]
      %v331 = vld [vmem:[#allocation2 + $0xf8] sm:$0xff]
      %v332 = vld [vmem:[%s237] sm:$0xff]
      %v333 = vld [vmem:[%s237 + $0x8] sm:$0xff]
      %v334 = vld [vmem:[%s237 + $0x10] sm:$0xff]
      %v335 = vld [vmem:[%s237 + $0x18] sm:$0xff]
      %v336 = vld [vmem:[%s237 + $0x20] sm:$0xff]
      %v337 = vld [vmem:[%s237 + $0x28] sm:$0xff]
      %v338 = vld [vmem:[%s237 + $0x30] sm:$0xff]
      %v339 = vld [vmem:[%s237 + $0x38] sm:$0xff]
      %v340 = vld [vmem:[%s237 + $0x40] sm:$0xff]
      %v341 = vld [vmem:[%s237 + $0x48] sm:$0xff]
      %v342 = vld [vmem:[%s237 + $0x50] sm:$0xff]
      %v343 = vld [vmem:[%s237 + $0x58] sm:$0xff]
      %v344 = vld [vmem:[%s237 + $0x60] sm:$0xff]
      %v345 = vld [vmem:[%s237 + $0x68] sm:$0xff]
      %v346 = vld [vmem:[%s237 + $0x70] sm:$0xff]
      %v347 = vld [vmem:[%s237 + $0x78] sm:$0xff]
      %v348 = vld [vmem:[%s237 + $0x80] sm:$0xff]
      %v349 = vld [vmem:[%s237 + $0x88] sm:$0xff]
      %v350 = vld [vmem:[%s237 + $0x90] sm:$0xff]
      %v351 = vld [vmem:[%s237 + $0x98] sm:$0xff]
      %v352 = vld [vmem:[%s237 + $0xa0] sm:$0xff]
      %v353 = vld [vmem:[%s237 + $0xa8] sm:$0xff]
      %v354 = vld [vmem:[%s237 + $0xb0] sm:$0xff]
      %v355 = vld [vmem:[%s237 + $0xb8] sm:$0xff]
      %v356 = vld [vmem:[%s237 + $0xc0] sm:$0xff]
      %v357 = vld [vmem:[%s237 + $0xc8] sm:$0xff]
      %v358 = vld [vmem:[%s237 + $0xd0] sm:$0xff]
      %v359 = vld [vmem:[%s237 + $0xd8] sm:$0xff]
      %v360 = vld [vmem:[%s237 + $0xe0] sm:$0xff]
      %v361 = vld [vmem:[%s237 + $0xe8] sm:$0xff]
      %v362 = vld [vmem:[%s237 + $0xf0] sm:$0xff]
      %v363 = vld [vmem:[%s237 + $0xf8] sm:$0xff]
      %v364 = vld [vmem:[%s246] sm:$0xff]
      %v365 = vld [vmem:[%s246 + $0x8] sm:$0xff]
      %v366 = vld [vmem:[%s246 + $0x10] sm:$0xff]
      %v367 = vld [vmem:[%s246 + $0x18] sm:$0xff]
      %v368 = vld [vmem:[%s246 + $0x20] sm:$0xff]
      %v369 = vld [vmem:[%s246 + $0x28] sm:$0xff]
      %v370 = vld [vmem:[%s246 + $0x30] sm:$0xff]
      %v371 = vld [vmem:[%s246 + $0x38] sm:$0xff]
      %v372 = vld [vmem:[%s246 + $0x40] sm:$0xff]
      %v373 = vld [vmem:[%s246 + $0x48] sm:$0xff]
      %v374 = vld [vmem:[%s246 + $0x50] sm:$0xff]
      %v375 = vld [vmem:[%s246 + $0x58] sm:$0xff]
      %v376 = vld [vmem:[%s246 + $0x60] sm:$0xff]
      %v377 = vld [vmem:[%s246 + $0x68] sm:$0xff]
      %v378 = vld [vmem:[%s246 + $0x70] sm:$0xff]
      %v379 = vld [vmem:[%s246 + $0x78] sm:$0xff]
      %380 = vmatpush.msra.mxu0 %v379
      %381 = vmatpush.msra.mxu0 %v378
      %382 = vmatpush.msra.mxu0 %v377
      %383 = vmatpush.msra.mxu0 %v376
      %384 = vmatpush.msra.mxu0 %v375
      %385 = vmatpush.msra.mxu0 %v374
      %386 = vmatpush.msra.mxu0 %v373
      %387 = vmatpush.msra.mxu0 %v372
      %388 = vmatpush.msra.mxu0 %v371
      %389 = vmatpush.msra.mxu0 %v370
      %390 = vmatpush.msra.mxu0 %v369
      %391 = vmatpush.msra.mxu0 %v368
      %392 = vmatpush.msra.mxu0 %v367
      %393 = vmatpush.msra.mxu0 %v366
      %394 = vmatpush.msra.mxu0 %v365
      %395 = vmatpush.msra.mxu0 %v364
      %396 = vmatmul.f32.gmra.mxu0 %v332
      %v397 = vpop.f32.mrf.mxu0
      %v398 = vadd.f32 0.0, %v397
      %399 = vmatmul.f32.gmra.mxu0 %v333
      %v400 = vpop.f32.mrf.mxu0
      %v401 = vadd.f32 0.0, %v400
      %402 = vmatmul.f32.gmra.mxu0 %v334
      %v403 = vpop.f32.mrf.mxu0
      %v404 = vadd.f32 0.0, %v403
      %405 = vmatmul.f32.gmra.mxu0 %v335
      %v406 = vpop.f32.mrf.mxu0
      %v407 = vadd.f32 0.0, %v406
      %408 = vmatmul.f32.gmra.mxu0 %v336
      %v409 = vpop.f32.mrf.mxu0
      %v410 = vadd.f32 0.0, %v409
      %411 = vmatmul.f32.gmra.mxu0 %v337
      %v412 = vpop.f32.mrf.mxu0
      %v413 = vadd.f32 0.0, %v412
      %414 = vmatmul.f32.gmra.mxu0 %v338
      %v415 = vpop.f32.mrf.mxu0
      %v416 = vadd.f32 0.0, %v415
      %417 = vmatmul.f32.gmra.mxu0 %v339
      %v418 = vpop.f32.mrf.mxu0
      %v419 = vadd.f32 0.0, %v418
      %420 = vmatmul.f32.gmra.mxu0 %v340
      %v421 = vpop.f32.mrf.mxu0
      %v422 = vadd.f32 0.0, %v421
      %423 = vmatmul.f32.gmra.mxu0 %v341
      %v424 = vpop.f32.mrf.mxu0
      %v425 = vadd.f32 0.0, %v424
      %426 = vmatmul.f32.gmra.mxu0 %v342
      %v427 = vpop.f32.mrf.mxu0
      %v428 = vadd.f32 0.0, %v427
      %429 = vmatmul.f32.gmra.mxu0 %v343
      %v430 = vpop.f32.mrf.mxu0
      %v431 = vadd.f32 0.0, %v430
      %432 = vmatmul.f32.gmra.mxu0 %v344
      %v433 = vpop.f32.mrf.mxu0
      %v434 = vadd.f32 0.0, %v433
      %435 = vmatmul.f32.gmra.mxu0 %v345
      %v436 = vpop.f32.mrf.mxu0
      %v437 = vadd.f32 0.0, %v436
      %438 = vmatmul.f32.gmra.mxu0 %v346
      %v439 = vpop.f32.mrf.mxu0
      %v440 = vadd.f32 0.0, %v439
      %441 = vmatmul.f32.gmra.mxu0 %v347
      %v442 = vpop.f32.mrf.mxu0
      %v443 = vadd.f32 0.0, %v442
      %444 = vmatmul.f32.gmra.mxu0 %v348
      %v445 = vpop.f32.mrf.mxu0
      %v446 = vadd.f32 0.0, %v445
      %447 = vmatmul.f32.gmra.mxu0 %v349
      %v448 = vpop.f32.mrf.mxu0
      %v449 = vadd.f32 0.0, %v448
      %450 = vmatmul.f32.gmra.mxu0 %v350
      %v451 = vpop.f32.mrf.mxu0
      %v452 = vadd.f32 0.0, %v451
      %453 = vmatmul.f32.gmra.mxu0 %v351
      %v454 = vpop.f32.mrf.mxu0
      %v455 = vadd.f32 0.0, %v454
      %456 = vmatmul.f32.gmra.mxu0 %v352
      %v457 = vpop.f32.mrf.mxu0
      %v458 = vadd.f32 0.0, %v457
      %459 = vmatmul.f32.gmra.mxu0 %v353
      %v460 = vpop.f32.mrf.mxu0
      %v461 = vadd.f32 0.0, %v460
      %462 = vmatmul.f32.gmra.mxu0 %v354
      %v463 = vpop.f32.mrf.mxu0
      %v464 = vadd.f32 0.0, %v463
      %465 = vmatmul.f32.gmra.mxu0 %v355
      %v466 = vpop.f32.mrf.mxu0
      %v467 = vadd.f32 0.0, %v466
      %468 = vmatmul.f32.gmra.mxu0 %v356
      %v469 = vpop.f32.mrf.mxu0
      %v470 = vadd.f32 0.0, %v469
      %471 = vmatmul.f32.gmra.mxu0 %v357
      %v472 = vpop.f32.mrf.mxu0
      %v473 = vadd.f32 0.0, %v472
      %474 = vmatmul.f32.gmra.mxu0 %v358
      %v475 = vpop.f32.mrf.mxu0
      %v476 = vadd.f32 0.0, %v475
      %477 = vmatmul.f32.gmra.mxu0 %v359
      %v478 = vpop.f32.mrf.mxu0
      %v479 = vadd.f32 0.0, %v478
      %480 = vmatmul.f32.gmra.mxu0 %v360
      %v481 = vpop.f32.mrf.mxu0
      %v482 = vadd.f32 0.0, %v481
      %483 = vmatmul.f32.gmra.mxu0 %v361
      %v484 = vpop.f32.mrf.mxu0
      %v485 = vadd.f32 0.0, %v484
      %486 = vmatmul.f32.gmra.mxu0 %v362
      %v487 = vpop.f32.mrf.mxu0
      %v488 = vadd.f32 0.0, %v487
      %489 = vmatmul.f32.gmra.mxu0 %v363
      %v490 = vpop.f32.mrf.mxu0
      %v491 = vadd.f32 0.0, %v490
      %492 = vdwg.mxu0
      %v493 = vadd.f32 %v300, %v398
      %v494 = vadd.f32 %v301, %v401
      %v495 = vadd.f32 %v302, %v404
      %v496 = vadd.f32 %v303, %v407
      %v497 = vadd.f32 %v304, %v410
      %v498 = vadd.f32 %v305, %v413
      %v499 = vadd.f32 %v306, %v416
      %v500 = vadd.f32 %v307, %v419
      %v501 = vadd.f32 %v308, %v422
      %v502 = vadd.f32 %v309, %v425
      %v503 = vadd.f32 %v310, %v428
      %v504 = vadd.f32 %v311, %v431
      %v505 = vadd.f32 %v312, %v434
      %v506 = vadd.f32 %v313, %v437
      %v507 = vadd.f32 %v314, %v440
      %v508 = vadd.f32 %v315, %v443
      %v509 = vadd.f32 %v316, %v446
      %v510 = vadd.f32 %v317, %v449
      %v511 = vadd.f32 %v318, %v452
      %v512 = vadd.f32 %v319, %v455
      %v513 = vadd.f32 %v320, %v458
      %v514 = vadd.f32 %v321, %v461
      %v515 = vadd.f32 %v322, %v464
      %v516 = vadd.f32 %v323, %v467
      %v517 = vadd.f32 %v324, %v470
      %v518 = vadd.f32 %v325, %v473
      %v519 = vadd.f32 %v326, %v476
      %v520 = vadd.f32 %v327, %v479
      %v521 = vadd.f32 %v328, %v482
      %v522 = vadd.f32 %v329, %v485
      %v523 = vadd.f32 %v330, %v488
      %v524 = vadd.f32 %v331, %v491
      %525 = vst [vmem:[#allocation2] sm:$0xff] %v493
      %526 = vst [vmem:[#allocation2 + $0x8] sm:$0xff] %v494
      %527 = vst [vmem:[#allocation2 + $0x10] sm:$0xff] %v495
      %528 = vst [vmem:[#allocation2 + $0x18] sm:$0xff] %v496
      %529 = vst [vmem:[#allocation2 + $0x20] sm:$0xff] %v497
      %530 = vst [vmem:[#allocation2 + $0x28] sm:$0xff] %v498
      %531 = vst [vmem:[#allocation2 + $0x30] sm:$0xff] %v499
      %532 = vst [vmem:[#allocation2 + $0x38] sm:$0xff] %v500
      %533 = vst [vmem:[#allocation2 + $0x40] sm:$0xff] %v501
      %534 = vst [vmem:[#allocation2 + $0x48] sm:$0xff] %v502
      %535 = vst [vmem:[#allocation2 + $0x50] sm:$0xff] %v503
      %536 = vst [vmem:[#allocation2 + $0x58] sm:$0xff] %v504
      %537 = vst [vmem:[#allocation2 + $0x60] sm:$0xff] %v505
      %538 = vst [vmem:[#allocation2 + $0x68] sm:$0xff] %v506
      %539 = vst [vmem:[#allocation2 + $0x70] sm:$0xff] %v507
      %540 = vst [vmem:[#allocation2 + $0x78] sm:$0xff] %v508
      %541 = vst [vmem:[#allocation2 + $0x80] sm:$0xff] %v509
      %542 = vst [vmem:[#allocation2 + $0x88] sm:$0xff] %v510
      %543 = vst [vmem:[#allocation2 + $0x90] sm:$0xff] %v511
      %544 = vst [vmem:[#allocation2 + $0x98] sm:$0xff] %v512
      %545 = vst [vmem:[#allocation2 + $0xa0] sm:$0xff] %v513
      %546 = vst [vmem:[#allocation2 + $0xa8] sm:$0xff] %v514
      %547 = vst [vmem:[#allocation2 + $0xb0] sm:$0xff] %v515
      %548 = vst [vmem:[#allocation2 + $0xb8] sm:$0xff] %v516
      %549 = vst [vmem:[#allocation2 + $0xc0] sm:$0xff] %v517
      %550 = vst [vmem:[#allocation2 + $0xc8] sm:$0xff] %v518
      %551 = vst [vmem:[#allocation2 + $0xd0] sm:$0xff] %v519
      %552 = vst [vmem:[#allocation2 + $0xd8] sm:$0xff] %v520
      %553 = vst [vmem:[#allocation2 + $0xe0] sm:$0xff] %v521
      %554 = vst [vmem:[#allocation2 + $0xe8] sm:$0xff] %v522
      %555 = vst [vmem:[#allocation2 + $0xf0] sm:$0xff] %v523
      %556 = vst [vmem:[#allocation2 + $0xf8] sm:$0xff] %v524
      // Predicated region
      $region33: #{conv_block.2} parent=27 // pred_check
        %p557 = pneg %p264
      $region34: #{conv_block.2} parent=27 // pred_check_branch
        %559 = sbr.rel (%p557) target = $region36
      $region35: #{conv_block.2} parent=27 // pred_region
        %v560 = vld [vmem:[#allocation2] sm:$0xff]
        %v561 = vld [vmem:[#allocation2 + $0x8] sm:$0xff]
        %v562 = vld [vmem:[#allocation2 + $0x10] sm:$0xff]
        %v563 = vld [vmem:[#allocation2 + $0x18] sm:$0xff]
        %v564 = vld [vmem:[#allocation2 + $0x20] sm:$0xff]
        %v565 = vld [vmem:[#allocation2 + $0x28] sm:$0xff]
        %v566 = vld [vmem:[#allocation2 + $0x30] sm:$0xff]
        %v567 = vld [vmem:[#allocation2 + $0x38] sm:$0xff]
        %v568 = vld [vmem:[#allocation2 + $0x40] sm:$0xff]
        %v569 = vld [vmem:[#allocation2 + $0x48] sm:$0xff]
        %v570 = vld [vmem:[#allocation2 + $0x50] sm:$0xff]
        %v571 = vld [vmem:[#allocation2 + $0x58] sm:$0xff]
        %v572 = vld [vmem:[#allocation2 + $0x60] sm:$0xff]
        %v573 = vld [vmem:[#allocation2 + $0x68] sm:$0xff]
        %v574 = vld [vmem:[#allocation2 + $0x70] sm:$0xff]
        %v575 = vld [vmem:[#allocation2 + $0x78] sm:$0xff]
        %v576 = vld [vmem:[#allocation2 + $0x80] sm:$0xff]
        %v577 = vld [vmem:[#allocation2 + $0x88] sm:$0xff]
        %v578 = vld [vmem:[#allocation2 + $0x90] sm:$0xff]
        %v579 = vld [vmem:[#allocation2 + $0x98] sm:$0xff]
        %v580 = vld [vmem:[#allocation2 + $0xa0] sm:$0xff]
        %v581 = vld [vmem:[#allocation2 + $0xa8] sm:$0xff]
        %v582 = vld [vmem:[#allocation2 + $0xb0] sm:$0xff]
        %v583 = vld [vmem:[#allocation2 + $0xb8] sm:$0xff]
        %v584 = vld [vmem:[#allocation2 + $0xc0] sm:$0xff]
        %v585 = vld [vmem:[#allocation2 + $0xc8] sm:$0xff]
        %v586 = vld [vmem:[#allocation2 + $0xd0] sm:$0xff]
        %v587 = vld [vmem:[#allocation2 + $0xd8] sm:$0xff]
        %v588 = vld [vmem:[#allocation2 + $0xe0] sm:$0xff]
        %v589 = vld [vmem:[#allocation2 + $0xe8] sm:$0xff]
        %v590 = vld [vmem:[#allocation2 + $0xf0] sm:$0xff]
        %v591 = vld [vmem:[#allocation2 + $0xf8] sm:$0xff]
        %592 = vst [vmem:[%s255] sm:$0xff] %v560
        %593 = vst [vmem:[%s255 + $0x8] sm:$0xff] %v561
        %594 = vst [vmem:[%s255 + $0x10] sm:$0xff] %v562
        %595 = vst [vmem:[%s255 + $0x18] sm:$0xff] %v563
        %596 = vst [vmem:[%s255 + $0x20] sm:$0xff] %v564
        %597 = vst [vmem:[%s255 + $0x28] sm:$0xff] %v565
        %598 = vst [vmem:[%s255 + $0x30] sm:$0xff] %v566
        %599 = vst [vmem:[%s255 + $0x38] sm:$0xff] %v567
        %600 = vst [vmem:[%s255 + $0x40] sm:$0xff] %v568
        %601 = vst [vmem:[%s255 + $0x48] sm:$0xff] %v569
        %602 = vst [vmem:[%s255 + $0x50] sm:$0xff] %v570
        %603 = vst [vmem:[%s255 + $0x58] sm:$0xff] %v571
        %604 = vst [vmem:[%s255 + $0x60] sm:$0xff] %v572
        %605 = vst [vmem:[%s255 + $0x68] sm:$0xff] %v573
        %606 = vst [vmem:[%s255 + $0x70] sm:$0xff] %v574
        %607 = vst [vmem:[%s255 + $0x78] sm:$0xff] %v575
        %608 = vst [vmem:[%s255 + $0x80] sm:$0xff] %v576
        %609 = vst [vmem:[%s255 + $0x88] sm:$0xff] %v577
        %610 = vst [vmem:[%s255 + $0x90] sm:$0xff] %v578
        %611 = vst [vmem:[%s255 + $0x98] sm:$0xff] %v579
        %612 = vst [vmem:[%s255 + $0xa0] sm:$0xff] %v580
        %613 = vst [vmem:[%s255 + $0xa8] sm:$0xff] %v581
        %614 = vst [vmem:[%s255 + $0xb0] sm:$0xff] %v582
        %615 = vst [vmem:[%s255 + $0xb8] sm:$0xff] %v583
        %616 = vst [vmem:[%s255 + $0xc0] sm:$0xff] %v584
        %617 = vst [vmem:[%s255 + $0xc8] sm:$0xff] %v585
        %618 = vst [vmem:[%s255 + $0xd0] sm:$0xff] %v586
        %619 = vst [vmem:[%s255 + $0xd8] sm:$0xff] %v587
        %620 = vst [vmem:[%s255 + $0xe0] sm:$0xff] %v588
        %621 = vst [vmem:[%s255 + $0xe8] sm:$0xff] %v589
        %622 = vst [vmem:[%s255 + $0xf0] sm:$0xff] %v590
        %623 = vst [vmem:[%s255 + $0xf8] sm:$0xff] %v591
        %v624 = vadd.f32 %v560, %v561
        %v625 = vadd.f32 %v624, %v562
        %v626 = vadd.f32 %v625, %v563
        %v627 = vadd.f32 %v626, %v564
        %v628 = vadd.f32 %v627, %v565
        %v629 = vadd.f32 %v628, %v566
        %v630 = vadd.f32 %v629, %v567
        %v631 = vadd.f32 %v630, %v568
        %v632 = vadd.f32 %v631, %v569
        %v633 = vadd.f32 %v632, %v570
        %v634 = vadd.f32 %v633, %v571
        %v635 = vadd.f32 %v634, %v572
        %v636 = vadd.f32 %v635, %v573
        %v637 = vadd.f32 %v636, %v574
        %v638 = vadd.f32 %v637, %v575
        %v639 = vadd.f32 %v638, %v576
        %v640 = vadd.f32 %v639, %v577
        %v641 = vadd.f32 %v640, %v578
        %v642 = vadd.f32 %v641, %v579
        %v643 = vadd.f32 %v642, %v580
        %v644 = vadd.f32 %v643, %v581
        %v645 = vadd.f32 %v644, %v582
        %v646 = vadd.f32 %v645, %v583
        %v647 = vadd.f32 %v646, %v584
        %v648 = vadd.f32 %v647, %v585
        %v649 = vadd.f32 %v648, %v586
        %v650 = vadd.f32 %v649, %v587
        %v651 = vadd.f32 %v650, %v588
        %v652 = vadd.f32 %v651, %v589
        %v653 = vadd.f32 %v652, %v590
        %v654 = vadd.f32 %v653, %v591
        %v655 = vrot.slane %v654, 4
        %v656 = vadd.f32 %v654, %v655
        %v657 = vrot.slane %v656, 2
        %v658 = vadd.f32 %v656, %v657
        %v659 = vrot.slane %v658, 1
        %v660 = vadd.f32 %v658, %v659
        %v661 = vmul.f32 %v560, %v560
        %v662 = vmul.f32 %v561, %v561
        %v663 = vmul.f32 %v562, %v562
        %v664 = vmul.f32 %v563, %v563
        %v665 = vmul.f32 %v564, %v564
        %v666 = vmul.f32 %v565, %v565
        %v667 = vmul.f32 %v566, %v566
        %v668 = vmul.f32 %v567, %v567
        %v669 = vmul.f32 %v568, %v568
        %v670 = vmul.f32 %v569, %v569
        %v671 = vmul.f32 %v570, %v570
        %v672 = vmul.f32 %v571, %v571
        %v673 = vmul.f32 %v572, %v572
        %v674 = vmul.f32 %v573, %v573
        %v675 = vmul.f32 %v574, %v574
        %v676 = vmul.f32 %v575, %v575
        %v677 = vmul.f32 %v576, %v576
        %v678 = vmul.f32 %v577, %v577
        %v679 = vmul.f32 %v578, %v578
        %v680 = vmul.f32 %v579, %v579
        %v681 = vmul.f32 %v580, %v580
        %v682 = vmul.f32 %v581, %v581
        %v683 = vmul.f32 %v582, %v582
        %v684 = vmul.f32 %v583, %v583
        %v685 = vmul.f32 %v584, %v584
        %v686 = vmul.f32 %v585, %v585
        %v687 = vmul.f32 %v586, %v586
        %v688 = vmul.f32 %v587, %v587
        %v689 = vmul.f32 %v588, %v588
        %v690 = vmul.f32 %v589, %v589
        %v691 = vmul.f32 %v590, %v590
        %v692 = vmul.f32 %v591, %v591
        %v693 = vadd.f32 %v661, %v662
        %v694 = vadd.f32 %v693, %v663
        %v695 = vadd.f32 %v694, %v664
        %v696 = vadd.f32 %v695, %v665
        %v697 = vadd.f32 %v696, %v666
        %v698 = vadd.f32 %v697, %v667
        %v699 = vadd.f32 %v698, %v668
        %v700 = vadd.f32 %v699, %v669
        %v701 = vadd.f32 %v700, %v670
        %v702 = vadd.f32 %v701, %v671
        %v703 = vadd.f32 %v702, %v672
        %v704 = vadd.f32 %v703, %v673
        %v705 = vadd.f32 %v704, %v674
        %v706 = vadd.f32 %v705, %v675
        %v707 = vadd.f32 %v706, %v676
        %v708 = vadd.f32 %v707, %v677
        %v709 = vadd.f32 %v708, %v678
        %v710 = vadd.f32 %v709, %v679
        %v711 = vadd.f32 %v710, %v680
        %v712 = vadd.f32 %v711, %v681
        %v713 = vadd.f32 %v712, %v682
        %v714 = vadd.f32 %v713, %v683
        %v715 = vadd.f32 %v714, %v684
        %v716 = vadd.f32 %v715, %v685
        %v717 = vadd.f32 %v716, %v686
        %v718 = vadd.f32 %v717, %v687
        %v719 = vadd.f32 %v718, %v688
        %v720 = vadd.f32 %v719, %v689
        %v721 = vadd.f32 %v720, %v690
        %v722 = vadd.f32 %v721, %v691
        %v723 = vadd.f32 %v722, %v692
        %v724 = vrot.slane %v723, 4
        %v725 = vadd.f32 %v723, %v724
        %v726 = vrot.slane %v725, 2
        %v727 = vadd.f32 %v725, %v726
        %v728 = vrot.slane %v727, 1
        %v729 = vadd.f32 %v727, %v728
        %vm730 = vcmask 1040384
        %v731 = vsel %vm730, %v660, %v729
        %vm732 = vcmask 1041408
        %v733 = vsel %vm732, %v731, 0.0
        %734 = vst [vmem:[%s263] sm:$0xff] %v733
      $region36: #{conv_block.2} parent=27 // pred_fallthru
        _
      %s735 = smul.u32 32, %s20
      %p736 = scmp.lt.s32.totalorder %s735, 63
      %s737 = scalar_select %p736, %s735, 63
      %p738 = scmp.lt.s32.totalorder %s21, 0
      %s739 = scalar_select %p738, %s21, 0
      %s740 = sadd.s32 %s739, %s737
      %s741 = smul.addr %s740, 8
      %s742 = scalar_lea.vmem %s2, %s741
      %p743 = scmp.lt.s32.totalorder %s20, 1
      %s744 = scalar_select %p743, %s20, 1
      %p745 = scmp.lt.s32.totalorder %s21, 0
      %s746 = scalar_select %p745, %s21, 0
      %s747 = sadd.s32 %s746, %s744
      %s748 = smul.addr %s747, 8
      %s749 = scalar_lea.vmem %s3, %s748
      // Predicated region
      $region37: #{conv_block.2} parent=27 // pred_check
        %p750 = pneg %p110
      $region38: #{conv_block.2} parent=27 // pred_check_branch
        %752 = sbr.rel (%p750) target = $region40
      $region39: #{conv_block.2} parent=27 // pred_region
        %s753 = smul.u32 32, %s20
      $region40: #{conv_block.2} parent=27 // pred_fallthru
        _
      // Predicated region
      $region41: #{conv_block.2} parent=27 // pred_check
        %p754 = pneg %p138
      $region42: #{conv_block.2} parent=27 // pred_check_branch
        %756 = sbr.rel (%p754) target = $region44
      $region43: #{conv_block.2} parent=27 // pred_region
        _
      $region44: #{conv_block.2} parent=27 // pred_fallthru
        _
    $region28: #{conv_block.2} parent=5 // pred_fallthru
      _
    %p757 = scmp.le.s32.totalorder 2, %s10
    // Predicated region
    $region45: #{conv_block.2} parent=5 // pred_check
      %p758 = pneg %p757
    $region46: #{conv_block.2} parent=5 // pred_check_branch
      %760 = sbr.rel (%p758) target = $region48
    $region47: #{conv_block.2} parent=5 // pred_region
      %s761 = ssub.s32 %s10, 2
      // Predicated region
      $region49: #{conv_block.2} parent=47 // pred_check
        %p762 = pneg %p116
      $region50: #{conv_block.2} parent=47 // pred_check_branch
        %764 = sbr.rel (%p762) target = $region52
      $region51: #{conv_block.2} parent=47 // pred_region
        %s765 = smul.u32 32, %s23
        %p766 = scmp.lt.s32.totalorder %s765, 63
        %s767 = scalar_select %p766, %s765, 63
        %p768 = scmp.lt.s32.totalorder %s24, 0
        %s769 = scalar_select %p768, %s24, 0
        %s770 = sadd.s32 %s769, %s767
        %s771 = smul.addr %s770, 8
        %s772 = scalar_lea.vmem %s2, %s771
      $region52: #{conv_block.2} parent=47 // pred_fallthru
        _
      // Predicated region
      $region53: #{conv_block.2} parent=47 // pred_check
        %p773 = pneg %p144
      $region54: #{conv_block.2} parent=47 // pred_check_branch
        %775 = sbr.rel (%p773) target = $region56
      $region55: #{conv_block.2} parent=47 // pred_region
        %p776 = scmp.lt.s32.totalorder %s23, 1
        %s777 = scalar_select %p776, %s23, 1
        %p778 = scmp.lt.s32.totalorder %s24, 0
        %s779 = scalar_select %p778, %s24, 0
        %s780 = sadd.s32 %s779, %s777
        %s781 = smul.addr %s780, 8
        %s782 = scalar_lea.vmem %s3, %s781
      $region56: #{conv_block.2} parent=47 // pred_fallthru
        _
    $region48: #{conv_block.2} parent=5 // pred_fallthru
      _
  $region6: #{conv_block.2} parent=0 // loop_footer
    %s14 = sadd.s32 1, %s10
  $region7: #{conv_block.2} parent=0 // loop_footer_branch
    %9 = sbr.rel target = $region3
  $region8: #{conv_block.2} parent=0 // loop_exit
    _

</llo_original>
